<compile_context>
chip_gen: v7x
topology: tpu7x:2x2x1
jax: 0.10.0
libtpu: 0.0.40
codegen_flags: <defaults>
</compile_context>

<pallas_src>
import jax
import jax.numpy as jnp
from jax import lax
from jax.experimental import pallas as pl
from jax.experimental.pallas import tpu as pltpu


def _spd_conv_kernel(w_ref, x_ref, b_ref, o_ref):
    """One pixel-tile per grid step.

    w_ref: (Cout, K)   BN-scale-folded conv weights, K = 9*Cin (tap-major, then Cin)
    x_ref: (K, TM)     im2col slab tile; pixels live on the lane axis
    b_ref: (Cout, 1)   folded BN bias
    o_ref: (Cout, TM)  output tile (lane-dense, unmasked stores)
    """
    acc = jnp.dot(w_ref[...], x_ref[...], preferred_element_type=jnp.float32)
    y = acc + b_ref[...]                       # (Cout, 1) broadcasts over lanes
    # SiLU = y * sigmoid(y); lax.logistic keeps the transcendental on the EUP.
    o_ref[...] = (y * lax.logistic(y)).astype(o_ref.dtype)


def spd_block_pallas(x_nchw, w_oihw, gamma, beta, run_mean, run_var,
                     *, block_size=2, eps=1e-5, tile_m=512):
    """SpdBlock forward. x_nchw: (N, C, H, W) float32 -> (N, Cout, H//bs, W//bs)."""
    N, C, H, W = x_nchw.shape
    bs = block_size
    assert H % bs == 0 and W % bs == 0
    Ho, Wo = H // bs, W // bs
    Cin = C * bs * bs
    Cout = w_oihw.shape[0]
    K = 9 * Cin

    # ---- space-to-depth (matches the torch.cat channel order exactly) ----
    a = jnp.concatenate(
        [x_nchw[..., ::bs, ::bs],
         x_nchw[..., 1::bs, ::bs],
         x_nchw[..., ::bs, 1::bs],
         x_nchw[..., 1::bs, 1::bs]], axis=1)                  # (N, Cin, Ho, Wo)

    # NCHW -> NHWC, 1-pixel halo pad for the 3x3 / pad=1 conv
    a_nhwc = jnp.transpose(a, (0, 2, 3, 1))                   # (N, Ho, Wo, Cin)
    a_pad = jnp.pad(a_nhwc, ((0, 0), (1, 1), (1, 1), (0, 0))) # (N, Ho+2, Wo+2, Cin)

    # ---- im2col slab: (9*Cin, N*Ho*Wo), tap-major then channel ----
    taps = [a_pad[:, dy:dy + Ho, dx:dx + Wo, :]
            for dy in range(3) for dx in range(3)]            # 9 x (N, Ho, Wo, Cin)
    patches = jnp.stack(taps, axis=0)                         # (9, N, Ho, Wo, Cin)
    slab = jnp.transpose(patches, (0, 4, 1, 2, 3)).reshape(K, N * Ho * Wo)

    # ---- fold BN into the conv: scale into weights, bias stays separate ----
    inv_std = 1.0 / jnp.sqrt(run_var + eps)
    scale = (gamma * inv_std).astype(jnp.float32)             # (Cout,)
    w_mat = jnp.transpose(w_oihw, (0, 2, 3, 1)).reshape(Cout, K)
    w_scaled = (w_mat * scale[:, None]).astype(jnp.float32)   # (Cout, K)
    bias = (beta - run_mean * scale).reshape(Cout, 1).astype(jnp.float32)

    # ---- pad the pixel axis to a multiple of the lane tile ----
    M_total = N * Ho * Wo
    if M_total > tile_m:
        tm = tile_m                                 # multiple of 128 by construction
    else:
        tm = max(128, ((M_total + 127) // 128) * 128)
    M_pad = pl.cdiv(M_total, tm) * tm
    if M_pad != M_total:
        slab = jnp.pad(slab, ((0, 0), (0, M_pad - M_total)))

    out = pl.pallas_call(
        _spd_conv_kernel,
        out_shape=jax.ShapeDtypeStruct((Cout, M_pad), jnp.float32),
        grid_spec=pltpu.PrefetchScalarGridSpec(
            num_scalar_prefetch=0,
            grid=(M_pad // tm,),
            in_specs=[
                pl.BlockSpec((Cout, K), lambda m: (0, 0)),
                pl.BlockSpec((K, tm), lambda m: (0, m)),
                pl.BlockSpec((Cout, 1), lambda m: (0, 0)),
            ],
            out_specs=pl.BlockSpec((Cout, tm), lambda m: (0, m)),
        ),
        compiler_params=pltpu.CompilerParams(
            dimension_semantics=("parallel",)),
    )(w_scaled, slab, bias)

    # (Cout, N*Ho*Wo) -> (N, Cout, Ho, Wo) to match the PyTorch output convention
    out = out[:, :M_total].reshape(Cout, N, Ho, Wo)
    return jnp.transpose(out, (1, 0, 2, 3))


def _reference(x_nchw, w_oihw, gamma, beta, run_mean, run_var,
               *, block_size=2, eps=1e-5):
    """Pure-JAX reference (same semantics as the PyTorch module in eval mode)."""
    bs = block_size
    a = jnp.concatenate(
        [x_nchw[..., ::bs, ::bs],
         x_nchw[..., 1::bs, ::bs],
         x_nchw[..., ::bs, 1::bs],
         x_nchw[..., 1::bs, 1::bs]], axis=1)
    y = lax.conv_general_dilated(
        a, w_oihw, window_strides=(1, 1), padding=((1, 1), (1, 1)),
        dimension_numbers=("NCHW", "OIHW", "NCHW"))
    g = gamma.reshape(1, -1, 1, 1)
    b = beta.reshape(1, -1, 1, 1)
    m = run_mean.reshape(1, -1, 1, 1)
    v = run_var.reshape(1, -1, 1, 1)
    y = (y - m) / jnp.sqrt(v + eps) * g + b
    return y * jax.nn.sigmoid(y)


if __name__ == "__main__":
    key = jax.random.PRNGKey(0)
    k_x, k_w, k_g, k_b, k_m, k_v = jax.random.split(key, 6)

    # SpdBlock(c1=4, c2=8, block_size=2) on x of shape (2, 4, 16, 16)
    N, C1, H, W = 2, 4, 16, 16
    C2 = 8
    C3 = C1 * 4  # c1 * block_size**2

    x = jax.random.normal(k_x, (N, C1, H, W), dtype=jnp.float32)

    # deterministic synthetic parameters
    w_conv = 0.1 * jax.random.normal(k_w, (C2, C3, 3, 3), dtype=jnp.float32)
    gamma = 1.0 + 0.1 * jax.random.normal(k_g, (C2,), dtype=jnp.float32)
    beta = 0.1 * jax.random.normal(k_b, (C2,), dtype=jnp.float32)
    run_mean = 0.1 * jax.random.normal(k_m, (C2,), dtype=jnp.float32)
    run_var = 1.0 + 0.1 * jnp.abs(jax.random.normal(k_v, (C2,), dtype=jnp.float32))

    out = spd_block_pallas(x, w_conv, gamma, beta, run_mean, run_var)
    out = jax.block_until_ready(out)

    ref = _reference(x, w_conv, gamma, beta, run_mean, run_var)
    assert out.shape == (N, C2, H // 2, W // 2), out.shape
    max_err = float(jnp.max(jnp.abs(out - ref)))
    assert max_err < 1e-3, max_err

    print("KERNEL_OK")
</pallas_src>

<mosaic_0001>
module attributes {stable_mosaic.version = 11 : i64} {
  func.func @_spd_conv_kernel(%arg0: i32, %arg1: memref<8x144xf32, #tpu.memory_space<vmem>>, %arg2: memref<144x128xf32, #tpu.memory_space<vmem>>, %arg3: memref<8x1xf32, #tpu.memory_space<vmem>>, %arg4: memref<8x128xf32, #tpu.memory_space<vmem>>) attributes {dimension_semantics = [#tpu.dimension_semantics<parallel>], iteration_bounds = array<i64: 1>, scalar_prefetch = 0 : i64, scratch_operands = 0 : i64, tpu.core_type = #tpu.core_type<tc>, window_params = [{pipeline_mode = #tpu.pipeline_mode<synchronous>, transform_indices = @transform_0, window_bounds = array<i64: 8, 144>}, {transform_indices = @transform_1, window_bounds = array<i64: 144, 128>}, {pipeline_mode = #tpu.pipeline_mode<synchronous>, transform_indices = @transform_2, window_bounds = array<i64: 8, 1>}, {transform_indices = @transform_3, window_bounds = array<i64: 8, 128>}]} {
    %c0 = arith.constant 0 : index
    %c0_0 = arith.constant 0 : index
    %0 = vector.load %arg1[%c0, %c0_0] : memref<8x144xf32, #tpu.memory_space<vmem>>, vector<8x144xf32>
    %c0_1 = arith.constant 0 : index
    %c0_2 = arith.constant 0 : index
    %1 = vector.load %arg2[%c0_1, %c0_2] : memref<144x128xf32, #tpu.memory_space<vmem>>, vector<144x128xf32>
    %cst = arith.constant dense<0.000000e+00> : vector<8x128xf32>
    %2 = tpu.matmul %0, %1, %cst {dimension_numbers = #tpu.dot_dimension_numbers<[1], [0], [0], [1], [0, 0, 1, 1], [], []>} : vector<8x144xf32>, vector<144x128xf32>, vector<8x128xf32> -> vector<8x128xf32>
    %c0_3 = arith.constant 0 : index
    %c0_4 = arith.constant 0 : index
    %3 = vector.load %arg3[%c0_3, %c0_4] : memref<8x1xf32, #tpu.memory_space<vmem>>, vector<8x1xf32>
    %4 = vector.broadcast %3 : vector<8x1xf32> to vector<8x128xf32>
    %5 = arith.addf %2, %4 : vector<8x128xf32>
    %6 = arith.negf %5 : vector<8x128xf32>
    %7 = math.exp %6 : vector<8x128xf32>
    %cst_5 = arith.constant 1.000000e+00 : f32
    %8 = vector.broadcast %cst_5 : f32 to vector<8x128xf32>
    %9 = arith.addf %8, %7 : vector<8x128xf32>
    %10 = arith.divf %8, %9 : vector<8x128xf32>
    %11 = arith.mulf %5, %10 : vector<8x128xf32>
    %c0_6 = arith.constant 0 : index
    %c0_7 = arith.constant 0 : index
    %12 = vector.load %arg4[%c0_6, %c0_7] : memref<8x128xf32, #tpu.memory_space<vmem>>, vector<8x128xf32>
    tpu.vector_store %arg4[%c0_6, %c0_7], %11 {strides = array<i32>} : memref<8x128xf32, #tpu.memory_space<vmem>>, vector<8x128xf32>,
    return
  }
  func.func @transform_0(%arg0: i32) -> (i32, i32) {
    %c0_i32 = arith.constant 0 : i32
    %c0_i32_0 = arith.constant 0 : i32
    %c0_i32_1 = arith.constant 0 : i32
    return %c0_i32, %c0_i32_0 : i32, i32
  }
  func.func @transform_1(%arg0: i32) -> (i32, i32) {
    %c0_i32 = arith.constant 0 : i32
    %c0_i32_0 = arith.constant 0 : i32
    return %c0_i32, %arg0 : i32, i32
  }
  func.func @transform_2(%arg0: i32) -> (i32, i32) {
    %c0_i32 = arith.constant 0 : i32
    %c0_i32_0 = arith.constant 0 : i32
    %c0_i32_1 = arith.constant 0 : i32
    return %c0_i32, %c0_i32_0 : i32, i32
  }
  func.func @transform_3(%arg0: i32) -> (i32, i32) {
    %c0_i32 = arith.constant 0 : i32
    %c0_i32_0 = arith.constant 0 : i32
    return %c0_i32, %arg0 : i32, i32
  }
}

</mosaic_0001>

<llo_original>
// kernel: tpu_custom_call.1
$region0: #{tpu_custom_call.1}
  #allocation0 [shape = 'u32[]', space=smem, size = 0x4, offset = 0x4, fixed_abs, tag = 'smem constant byte address 0x4 - core index']
  #allocation1 [shape = 'u32[144,128]{1,0:T(1,128)}', space=vmem, size = 0x12000, scoped, tag = 'internal scratch']
  %s0 = inlined_call_operand.hbm [shape: f32[8,144], index: 0, kind: input, shape index: {}]
  %s1 = inlined_call_operand.hbm [shape: f32[144,128], index: 1, kind: input, shape index: {}]
  %s2 = inlined_call_operand.vmem [shape: f32[8,1], index: 2, kind: input, shape index: {}]
  %s3 = inlined_call_operand.hbm [shape: f32[8,128], index: 3, kind: output, shape index: {}]
  %s4 = sld [smem:[#allocation0]]
  $region30: #{tpu_custom_call.1} parent=0
    _
  %s6 = ssub.s32 1, %s4
  %s7 = scalar_select 0, %s6, %s4
  $region1: #{tpu_custom_call.1} parent=0
    #allocation2 [shape = 'u8[8192]{0}', space=vmem, size = 0x2000, scoped, tag = 'input window, operand 0, single buffered']
    #allocation3 [shape = 's32[1]{0}', space=sflag, size = 0x4, scoped, tag = 'scoped memory for tpu_custom_call.1']
    #allocation4 [shape = 's32[1]{0}', space=sflag, size = 0x4, scoped, tag = 'scoped memory for tpu_custom_call.1']
    #allocation5 [shape = 'u8[73728]{0}', space=vmem, size = 0x12000, scoped, tag = 'input window, operand 1, single buffered']
    #allocation6 [shape = 's32[1]{0}', space=sflag, size = 0x4, scoped, tag = 'scoped memory for tpu_custom_call.1']
    #allocation7 [shape = 'u8[4096]{0}', space=vmem, size = 0x1000, scoped, tag = 'output window, operand 0, single buffered']
    %8 = vsyncpa [#allocation3], 0
    %9 = vsyncpa [#allocation6], 0
    %10 = vsyncpa [#allocation4], 0
    // Predicated region
    $region2: #{tpu_custom_call.1} parent=1 // pred_check
      _
    $region3: #{tpu_custom_call.1} parent=1 // pred_check_branch
      %12 = sbr.rel (0) target = $region5
    $region4: #{tpu_custom_call.1} parent=1 // pred_region
      %s14 = ssub.s32 256, 256
      %15 = vsyncadd [#allocation3], %s14
      %s17 = sshll.u32 [#allocation2], 4
      %s18 = int_to_ptr.vmem [resolvable:$true] %s17
      %20 = dma.hbm_to_vmem [thread:$0]  %s0, 256, %s18, [#allocation3]
    $region5: #{tpu_custom_call.1} parent=1 // pred_fallthru
      _
    // Predicated region
    $region6: #{tpu_custom_call.1} parent=1 // pred_check
      _
    $region7: #{tpu_custom_call.1} parent=1 // pred_check_branch
      %22 = sbr.rel (0) target = $region9
    $region8: #{tpu_custom_call.1} parent=1 // pred_region
      %s24 = ssub.s32 2304, 2304
      %25 = vsyncadd [#allocation6], %s24
      %s26 = sshll.u32 [#allocation5], 4
      %s27 = int_to_ptr.vmem [resolvable:$true] %s26
      %32 = dma.hbm_to_vmem [thread:$0]  %s1, 2304, %s27, [#allocation6], 128, 128, 8
    $region9: #{tpu_custom_call.1} parent=1 // pred_fallthru
      _
    // Predicated region
    $region10: #{tpu_custom_call.1} parent=1 // pred_check
      _
    $region11: #{tpu_custom_call.1} parent=1 // pred_check_branch
      %34 = sbr.rel (0) target = $region13
    $region12: #{tpu_custom_call.1} parent=1 // pred_region
      _
    $region13: #{tpu_custom_call.1} parent=1 // pred_fallthru
      _
    // Predicated region
    $region14: #{tpu_custom_call.1} parent=1 // pred_check
      _
    $region15: #{tpu_custom_call.1} parent=1 // pred_check_branch
      %36 = sbr.rel (0) target = $region17
    $region16: #{tpu_custom_call.1} parent=1 // pred_region
      %37 = dma.done [#allocation3], 256
    $region17: #{tpu_custom_call.1} parent=1 // pred_fallthru
      _
    // Predicated region
    $region18: #{tpu_custom_call.1} parent=1 // pred_check
      _
    $region19: #{tpu_custom_call.1} parent=1 // pred_check_branch
      %39 = sbr.rel (0) target = $region21
    $region20: #{tpu_custom_call.1} parent=1 // pred_region
      %40 = dma.done [#allocation6], 2304
    $region21: #{tpu_custom_call.1} parent=1 // pred_fallthru
      _
    %v41 = vld [vmem:[#allocation2] sm:$0xff]
    %v42 = vld [vmem:[#allocation2 + $0x8] sm:$0xff]
    %v43 = vld [vmem:[#allocation5] sm:$0xff]
    %v44 = vld [vmem:[#allocation5 + $0x8] sm:$0xff]
    %v45 = vld [vmem:[#allocation5 + $0x10] sm:$0xff]
    %v46 = vld [vmem:[#allocation5 + $0x18] sm:$0xff]
    %v47 = vld [vmem:[#allocation5 + $0x20] sm:$0xff]
    %v48 = vld [vmem:[#allocation5 + $0x28] sm:$0xff]
    %v49 = vld [vmem:[#allocation5 + $0x30] sm:$0xff]
    %v50 = vld [vmem:[#allocation5 + $0x38] sm:$0xff]
    %v51 = vld [vmem:[#allocation5 + $0x40] sm:$0xff]
    %v52 = vld [vmem:[#allocation5 + $0x48] sm:$0xff]
    %v53 = vld [vmem:[#allocation5 + $0x50] sm:$0xff]
    %v54 = vld [vmem:[#allocation5 + $0x58] sm:$0xff]
    %v55 = vld [vmem:[#allocation5 + $0x60] sm:$0xff]
    %v56 = vld [vmem:[#allocation5 + $0x68] sm:$0xff]
    %v57 = vld [vmem:[#allocation5 + $0x70] sm:$0xff]
    %v58 = vld [vmem:[#allocation5 + $0x78] sm:$0xff]
    %v59 = vld [vmem:[#allocation5 + $0x80] sm:$0xff]
    %v60 = vld [vmem:[#allocation5 + $0x88] sm:$0xff]
    %v61 = vld [vmem:[%s2] sm:$0xff]
    %63 = vset.pattern.permute.xlu0 0
    %64 = vperm.xlu0 %63, %v61
    %v65 = vpop.permute.xlu0 %64
    %vm67 = vcmask 130048
    %v69 = vsel %vm67, %v42, 0
    %71 = vmatprep.subr.mxu0 0.0
    %72 = vmatpush1.msra.mxu0 %v43
    %73 = vmatprep.subr.mxu0 0.0
    %74 = vmatpush1.msra.mxu0 %v44
    %75 = vmatprep.subr.mxu0 0.0
    %76 = vmatpush1.msra.mxu0 %v45
    %77 = vmatprep.subr.mxu0 0.0
    %78 = vmatpush1.msra.mxu0 %v46
    %79 = vmatprep.subr.mxu0 0.0
    %80 = vmatpush1.msra.mxu0 %v47
    %81 = vmatprep.subr.mxu0 0.0
    %82 = vmatpush1.msra.mxu0 %v48
    %83 = vmatprep.subr.mxu0 0.0
    %84 = vmatpush1.msra.mxu0 %v49
    %85 = vmatprep.subr.mxu0 0.0
    %86 = vmatpush1.msra.mxu0 %v50
    %87 = vmatprep.subr.mxu0 0.0
    %88 = vmatpush1.msra.mxu0 %v51
    %89 = vmatprep.subr.mxu0 0.0
    %90 = vmatpush1.msra.mxu0 %v52
    %91 = vmatprep.subr.mxu0 0.0
    %92 = vmatpush1.msra.mxu0 %v53
    %93 = vmatprep.subr.mxu0 0.0
    %94 = vmatpush1.msra.mxu0 %v54
    %95 = vmatprep.subr.mxu0 0.0
    %96 = vmatpush1.msra.mxu0 %v55
    %97 = vmatprep.subr.mxu0 0.0
    %98 = vmatpush1.msra.mxu0 %v56
    %99 = vmatprep.subr.mxu0 0.0
    %100 = vmatpush1.msra.mxu0 %v57
    %101 = vmatprep.subr.mxu0 0.0
    %102 = vmatpush1.msra.mxu0 %v58
    %103 = vmatprep.subr.mxu0 0.0
    %104 = vmatpush1.msra.mxu0 %v59
    %105 = vmatprep.subr.mxu0 0.0
    %106 = vmatpush1.msra.mxu0 %v60
    %107 = vmatprep.subr.mxu0 0.0
    %108 = vmatpush1.msra.mxu0 0.0
    %109 = vmatprep.subr.mxu0 0.0
    %110 = vmatpush1.msra.mxu0 0.0
    %111 = vmatprep.subr.mxu0 0.0
    %112 = vmatpush1.msra.mxu0 0.0
    %113 = vmatprep.subr.mxu0 0.0
    %114 = vmatpush1.msra.mxu0 0.0
    %115 = vmatprep.subr.mxu0 0.0
    %116 = vmatpush1.msra.mxu0 0.0
    %117 = vmatprep.subr.mxu0 0.0
    %118 = vmatpush1.msra.mxu0 0.0
    %119 = vmatprep.subr.mxu0 0.0
    %120 = vmatpush1.msra.mxu0 0.0
    %121 = vmatprep.subr.mxu0 0.0
    %122 = vmatpush1.msra.mxu0 0.0
    %123 = vmatprep.subr.mxu0 0.0
    %124 = vmatpush1.msra.mxu0 0.0
    %125 = vmatprep.subr.mxu0 0.0
    %126 = vmatpush1.msra.mxu0 0.0
    %127 = vmatprep.subr.mxu0 0.0
    %128 = vmatpush1.msra.mxu0 0.0
    %129 = vmatprep.subr.mxu0 0.0
    %130 = vmatpush1.msra.mxu0 0.0
    %131 = vmatprep.subr.mxu0 0.0
    %132 = vmatpush1.msra.mxu0 0.0
    %133 = vmatprep.subr.mxu0 0.0
    %134 = vmatpush1.msra.mxu0 0.0
    %135 = vmatprep.mubr.f32.mxu0 %v69
    %136 = vmatmul.mubr.f32.gmra.mrb[0].mxu0 %v41
    %v137 = vpop.f32.mrb[0].mxu0
    %v138 = vadd.f32 %v65, %v137
    %v139 = vpop.f32.mrb[0].mxu0
    %140 = vdwg.mxu0
    %v141 = vxor.u32 %v138, 2147483648
    %v142 = vmul.f32 %v141, 1.442695
    %v143 = vpow.pop %v142
    %v144 = vadd.f32 %v143, 1.0
    %v145 = vrcp.pop %v144
    %v146 = vmul.f32 1.0, %v145
    %v147 = vmul.f32 %v138, %v146
    %148 = vst [vmem:[#allocation7] sm:$0xff] %v147
    // Predicated region
    $region22: #{tpu_custom_call.1} parent=1 // pred_check
      _
    $region23: #{tpu_custom_call.1} parent=1 // pred_check_branch
      %150 = sbr.rel (0) target = $region25
    $region24: #{tpu_custom_call.1} parent=1 // pred_region
      %s152 = ssub.s32 128, 128
      %153 = vsyncadd [#allocation4], %s152
      %s155 = sshll.u32 [#allocation7], 4
      %s156 = int_to_ptr.vmem [resolvable:$true] %s155
      %158 = dma.vmem_to_hbm [thread:$0]  %s156, 128, %s3, [#allocation4]
    $region25: #{tpu_custom_call.1} parent=1 // pred_fallthru
      _
    // Predicated region
    $region26: #{tpu_custom_call.1} parent=1 // pred_check
      _
    $region27: #{tpu_custom_call.1} parent=1 // pred_check_branch
      %160 = sbr.rel (0) target = $region29
    $region28: #{tpu_custom_call.1} parent=1 // pred_region
      %161 = dma.done [#allocation4], 128
    $region29: #{tpu_custom_call.1} parent=1 // pred_fallthru
      _
    %162 = vsyncpa [#allocation3], 1
    %163 = vsyncpa [#allocation6], 1
    %164 = vsyncpa [#allocation4], 1

</llo_original>
